<compile_context>
chip_gen: v7x
topology: tpu7x:2x2x1
jax: 0.10.0
libtpu: 0.0.40
codegen_flags: <defaults>
</compile_context>

<pallas_src>
import functools

import jax
import jax.numpy as jnp
from jax.experimental import pallas as pl
from jax.experimental.pallas import tpu as pltpu


def _dice_bce_kernel(x_ref, t_ref, out_ref, *, num_tiles, rows, tile_rows,
                     chunk_rows, lanes, last_partial, grid_overcovers):
    i = pl.program_id(1)
    inner = pl.num_programs(1)
    g = pl.program_id(0) * inner + i          # global tile id

    # Per-core resident accumulator lives directly in the output block
    # (block index depends only on the core axis -> stays in VMEM across i).
    @pl.when(i == 0)
    def _():
        out_ref[...] = jnp.zeros_like(out_ref)

    n_chunks = tile_rows // chunk_rows

    def accumulate(masked):
        def chunk_body(ci, carry):
            if n_chunks > 1:
                off = pl.multiple_of(ci * chunk_rows, chunk_rows)
            else:
                off = 0
            x = x_ref[pl.ds(off, chunk_rows), :].astype(jnp.float32)
            t = t_ref[pl.ds(off, chunk_rows), :].astype(jnp.float32)

            # Numerically stable BCE-with-logits; sigmoid via one EUP tanh
            # (no VALU divide / compare-select chain).
            e = jnp.exp(-jnp.abs(x))
            bce = jnp.maximum(x, 0.0) - x * t + jnp.log1p(e)
            sig = 0.5 + 0.5 * jnp.tanh(0.5 * x)

            if masked:
                # Only traced for the single partial last tile: rows past the
                # valid extent of the flat data are Pallas block padding
                # (garbage/NaN) and are dropped by the selects.
                row = (jax.lax.broadcasted_iota(jnp.int32, x.shape, 0)
                       + g * tile_rows + off)
                valid = row < rows
                zero = jnp.zeros_like(x)
                bce = jnp.where(valid, bce, zero)
                sig = jnp.where(valid, sig, zero)
                t = jnp.where(valid, t, zero)

            # (chunk_rows,128) -> (8,128) with plain VPU vreg adds; the
            # cross-lane reduction is deferred to the JAX epilogue.
            def part(v):
                return jnp.sum(v.reshape(chunk_rows // 8, 8, lanes), axis=0)

            out_ref[0, 0] += part(bce)        # sum of BCE terms
            out_ref[0, 1] += part(sig * t)    # intersection
            out_ref[0, 2] += part(sig)        # sum of sigmoid(inputs)
            out_ref[0, 3] += part(t)          # sum of targets
            return carry

        if n_chunks == 1:
            chunk_body(0, 0)
        else:
            jax.lax.fori_loop(0, n_chunks, chunk_body, 0)

    if last_partial:
        @pl.when(g < num_tiles - 1)
        def _():
            accumulate(False)

        @pl.when(g == num_tiles - 1)
        def _():
            accumulate(True)
    elif grid_overcovers:
        # Odd tile count: the second core's final grid step maps to a clamped
        # (already processed) block; skip its accumulation entirely.
        @pl.when(g < num_tiles)
        def _():
            accumulate(False)
    else:
        accumulate(False)


def dice_bce_loss(inputs, targets, smooth=1.0, *, tile_rows=8192, lanes=128):
    """Pallas implementation of DiceBCELoss.forward (returns a scalar f32)."""
    assert inputs.shape == targets.shape
    n = int(inputs.size)

    x_flat = jnp.ravel(inputs)
    t_flat = jnp.ravel(targets)

    # Row alignment of the second-minor block dim depends on dtype packing.
    itemsize = min(jnp.dtype(inputs.dtype).itemsize,
                   jnp.dtype(targets.dtype).itemsize)
    row_align = 8 if itemsize >= 4 else (16 if itemsize == 2 else 32)
    align_elems = row_align * lanes

    n_main = (n // align_elems) * align_elems      # aligned prefix -> kernel
    rows = n_main // lanes

    part_sums = jnp.zeros((4,), dtype=jnp.float32)

    if rows > 0:
        # Identity slice + reshape (no HBM copy) when n is already aligned.
        x2d = x_flat[:n_main].reshape(rows, lanes)
        t2d = t_flat[:n_main].reshape(rows, lanes)

        # Big lane-dense DMA blocks; in-kernel compute chunks bound temps.
        t_rows = max(row_align, (int(tile_rows) // row_align) * row_align)
        t_rows = min(t_rows, rows)
        chunk_rows = min(1024, t_rows)
        t_rows = (t_rows // chunk_rows) * chunk_rows

        num_tiles = pl.cdiv(rows, t_rows)
        inner = pl.cdiv(num_tiles, 2)              # tiles per core
        last_partial = (num_tiles * t_rows) != rows
        grid_overcovers = (2 * inner) != num_tiles

        if grid_overcovers:
            def in_map(c, i):
                return (jnp.minimum(c * inner + i, num_tiles - 1), 0)
        else:
            def in_map(c, i):
                return (c * inner + i, 0)

        kernel = functools.partial(
            _dice_bce_kernel, num_tiles=num_tiles, rows=rows, tile_rows=t_rows,
            chunk_rows=chunk_rows, lanes=lanes, last_partial=last_partial,
            grid_overcovers=grid_overcovers)

        tile_spec = pl.BlockSpec((t_rows, lanes), in_map)

        partials = pl.pallas_call(
            kernel,
            out_shape=jax.ShapeDtypeStruct((2, 4, 8, lanes), jnp.float32),
            grid_spec=pltpu.PrefetchScalarGridSpec(
                num_scalar_prefetch=0,
                grid=(2, inner),
                in_specs=[tile_spec, tile_spec],
                out_specs=pl.BlockSpec((1, 4, 8, lanes),
                                       lambda c, i: (c, 0, 0, 0)),
            ),
            compiler_params=pltpu.CompilerParams(
                dimension_semantics=("parallel", "arbitrary"),
                vmem_limit_bytes=48 * 1024 * 1024,
            ),
        )(x2d, t2d)
        part_sums = jnp.sum(partials, axis=(0, 2, 3))

    # Tiny unaligned remainder (< row_align*lanes elements) in plain JAX:
    # avoids padding both full streams through HBM for a partial vreg row.
    if n_main < n:
        x_rem = x_flat[n_main:].astype(jnp.float32)
        t_rem = t_flat[n_main:].astype(jnp.float32)
        e = jnp.exp(-jnp.abs(x_rem))
        rem_bce = jnp.sum(jnp.maximum(x_rem, 0.0) - x_rem * t_rem
                          + jnp.log1p(e))
        sig = jax.nn.sigmoid(x_rem)
        part_sums = part_sums + jnp.stack(
            [rem_bce, jnp.sum(sig * t_rem), jnp.sum(sig), jnp.sum(t_rem)])

    s_bce, s_int, s_sig, s_tgt = (part_sums[0], part_sums[1],
                                  part_sums[2], part_sums[3])
    smooth = jnp.float32(smooth)
    bce_mean = s_bce / jnp.float32(n)
    dice = (2.0 * s_int + smooth) / (s_sig + s_tgt + smooth)
    return bce_mean + (1.0 - dice)


def _reference(inputs, targets, smooth=1.0):
    x = inputs.astype(jnp.float32)
    t = targets.astype(jnp.float32)
    bce = jnp.mean(jnp.maximum(x, 0.0) - x * t + jnp.log1p(jnp.exp(-jnp.abs(x))))
    sig = jax.nn.sigmoid(x).ravel()
    tf = t.ravel()
    inter = jnp.sum(sig * tf)
    dice = (2.0 * inter + smooth) / (jnp.sum(sig) + jnp.sum(tf) + smooth)
    return bce + (1.0 - dice)


if __name__ == "__main__":
    key = jax.random.PRNGKey(0)
    k1, k2, k3, k4 = jax.random.split(key, 4)

    # Case 1: NCHW-shaped logits/targets (1024-aligned size -> no copy, no mask).
    shape1 = (2, 4, 16, 16)
    logits1 = jax.random.normal(k1, shape1, dtype=jnp.float32)
    targets1 = (jax.random.uniform(k2, shape1) > 0.5).astype(jnp.float32)
    loss1 = jax.block_until_ready(dice_bce_loss(logits1, targets1, smooth=1.0))
    ref1 = _reference(logits1, targets1, smooth=1.0)
    assert jnp.allclose(loss1, ref1, rtol=1e-5, atol=1e-5), (loss1, ref1)

    # Case 2: odd-sized tensor (exercises kernel prefix + JAX remainder path).
    shape2 = (3, 5, 7, 11)
    logits2 = jax.random.normal(k3, shape2, dtype=jnp.float32)
    targets2 = (jax.random.uniform(k4, shape2) > 0.5).astype(jnp.float32)
    loss2 = jax.block_until_ready(dice_bce_loss(logits2, targets2, smooth=1.0))
    ref2 = _reference(logits2, targets2, smooth=1.0)
    assert jnp.allclose(loss2, ref2, rtol=1e-5, atol=1e-5), (loss2, ref2)

    print("KERNEL_OK")
</pallas_src>

<mosaic_0001>
module attributes {stable_mosaic.version = 11 : i64} {
  func.func @_dice_bce_kernel(%arg0: i32, %arg1: i32, %arg2: memref<16x128xf32, #tpu.memory_space<vmem>>, %arg3: memref<16x128xf32, #tpu.memory_space<vmem>>, %arg4: memref<1x4x8x128xf32, #tpu.memory_space<vmem>>) attributes {dimension_semantics = [#tpu.dimension_semantics<parallel>, #tpu.dimension_semantics<arbitrary>], iteration_bounds = array<i64: 2, 1>, scalar_prefetch = 0 : i64, scratch_operands = 0 : i64, tpu.core_type = #tpu.core_type<tc>, window_params = [{transform_indices = @transform_0, window_bounds = array<i64: 16, 128>}, {transform_indices = @transform_1, window_bounds = array<i64: 16, 128>}, {transform_indices = @transform_2, window_bounds = array<i64: 1, 4, 8, 128>}]} {
    %c1_i32 = arith.constant 1 : i32
    %0 = arith.muli %arg0, %c1_i32 : i32
    %1 = arith.addi %0, %arg1 : i32
    %c0_i32 = arith.constant 0 : i32
    %2 = arith.cmpi eq, %arg1, %c0_i32 : i32
    %3 = arith.extui %2 : i1 to i32
    %c0_i32_0 = arith.constant 0 : i32
    %4 = arith.cmpi ne, %3, %c0_i32_0 : i32
    scf.if %4 {
      %cst = arith.constant 0.000000e+00 : f32
      %8 = vector.broadcast %cst : f32 to vector<1x4x8x128xf32>
      %c0 = arith.constant 0 : index
      %c0_3 = arith.constant 0 : index
      %c0_4 = arith.constant 0 : index
      %c0_5 = arith.constant 0 : index
      %9 = vector.load %arg4[%c0, %c0_3, %c0_4, %c0_5] : memref<1x4x8x128xf32, #tpu.memory_space<vmem>>, vector<1x4x8x128xf32>
      tpu.vector_store %arg4[%c0, %c0_3, %c0_4, %c0_5], %8 {strides = array<i32>} : memref<1x4x8x128xf32, #tpu.memory_space<vmem>>, vector<1x4x8x128xf32>,
    } else {
    }
    %c1_i32_1 = arith.constant 1 : i32
    %5 = arith.cmpi slt, %1, %c1_i32_1 : i32
    %6 = arith.extui %5 : i1 to i32
    %c0_i32_2 = arith.constant 0 : i32
    %7 = arith.cmpi ne, %6, %c0_i32_2 : i32
    scf.if %7 {
      %c0 = arith.constant 0 : index
      %c0_3 = arith.constant 0 : index
      %8 = vector.load %arg2[%c0, %c0_3] : memref<16x128xf32, #tpu.memory_space<vmem>>, vector<16x128xf32>
      %c0_4 = arith.constant 0 : index
      %c0_5 = arith.constant 0 : index
      %9 = vector.load %arg3[%c0_4, %c0_5] : memref<16x128xf32, #tpu.memory_space<vmem>>, vector<16x128xf32>
      %10 = math.absf %8 : vector<16x128xf32>
      %cst = arith.constant 0.000000e+00 : f32
      %11 = vector.broadcast %cst : f32 to vector<16x128xf32>
      %12 = arith.subf %11, %10 : vector<16x128xf32>
      %13 = math.exp %12 : vector<16x128xf32>
      %cst_6 = arith.constant 0.000000e+00 : f32
      %14 = vector.broadcast %cst_6 : f32 to vector<16x128xf32>
      %15 = arith.maximumf %8, %14 : vector<16x128xf32>
      %16 = arith.mulf %8, %9 : vector<16x128xf32>
      %17 = arith.subf %15, %16 : vector<16x128xf32>
      %18 = math.log1p %13 : vector<16x128xf32>
      %19 = arith.addf %17, %18 : vector<16x128xf32>
      %cst_7 = arith.constant 5.000000e-01 : f32
      %20 = vector.broadcast %cst_7 : f32 to vector<16x128xf32>
      %21 = arith.mulf %20, %8 : vector<16x128xf32>
      %22 = math.tanh %21 : vector<16x128xf32>
      %cst_8 = arith.constant 5.000000e-01 : f32
      %23 = vector.broadcast %cst_8 : f32 to vector<16x128xf32>
      %24 = arith.mulf %23, %22 : vector<16x128xf32>
      %cst_9 = arith.constant 5.000000e-01 : f32
      %25 = vector.broadcast %cst_9 : f32 to vector<16x128xf32>
      %26 = arith.addf %25, %24 : vector<16x128xf32>
      %c0_10 = arith.constant 0 : index
      %c0_11 = arith.constant 0 : index
      %c0_12 = arith.constant 0 : index
      %c0_13 = arith.constant 0 : index
      %27 = vector.load %arg4[%c0_10, %c0_11, %c0_12, %c0_13] : memref<1x4x8x128xf32, #tpu.memory_space<vmem>>, vector<1x1x8x128xf32>
      %28 = vector.shape_cast %27 : vector<1x1x8x128xf32> to vector<8x128xf32>
      %29 = vector.shape_cast %19 : vector<16x128xf32> to vector<2x8x128xf32>
      %cst_14 = arith.constant dense<0.000000e+00> : vector<8x128xf32>
      %30 = vector.multi_reduction <add>, %29, %cst_14 [0] : vector<2x8x128xf32> to vector<8x128xf32>
      %31 = arith.addf %28, %30 : vector<8x128xf32>
      %c0_15 = arith.constant 0 : index
      %c0_16 = arith.constant 0 : index
      %c0_17 = arith.constant 0 : index
      %c0_18 = arith.constant 0 : index
      %32 = vector.load %arg4[%c0_15, %c0_16, %c0_17, %c0_18] : memref<1x4x8x128xf32, #tpu.memory_space<vmem>>, vector<1x1x8x128xf32>
      %33 = vector.shape_cast %32 : vector<1x1x8x128xf32> to vector<8x128xf32>
      %34 = vector.shape_cast %31 : vector<8x128xf32> to vector<1x1x8x128xf32>
      tpu.vector_store %arg4[%c0_15, %c0_16, %c0_17, %c0_18], %34 {strides = array<i32>} : memref<1x4x8x128xf32, #tpu.memory_space<vmem>>, vector<1x1x8x128xf32>,
      %c0_19 = arith.constant 0 : index
      %c1 = arith.constant 1 : index
      %c0_20 = arith.constant 0 : index
      %c0_21 = arith.constant 0 : index
      %35 = vector.load %arg4[%c0_19, %c1, %c0_20, %c0_21] : memref<1x4x8x128xf32, #tpu.memory_space<vmem>>, vector<1x1x8x128xf32>
      %36 = vector.shape_cast %35 : vector<1x1x8x128xf32> to vector<8x128xf32>
      %37 = arith.mulf %26, %9 : vector<16x128xf32>
      %38 = vector.shape_cast %37 : vector<16x128xf32> to vector<2x8x128xf32>
      %cst_22 = arith.constant dense<0.000000e+00> : vector<8x128xf32>
      %39 = vector.multi_reduction <add>, %38, %cst_22 [0] : vector<2x8x128xf32> to vector<8x128xf32>
      %40 = arith.addf %36, %39 : vector<8x128xf32>
      %c0_23 = arith.constant 0 : index
      %c1_24 = arith.constant 1 : index
      %c0_25 = arith.constant 0 : index
      %c0_26 = arith.constant 0 : index
      %41 = vector.load %arg4[%c0_23, %c1_24, %c0_25, %c0_26] : memref<1x4x8x128xf32, #tpu.memory_space<vmem>>, vector<1x1x8x128xf32>
      %42 = vector.shape_cast %41 : vector<1x1x8x128xf32> to vector<8x128xf32>
      %43 = vector.shape_cast %40 : vector<8x128xf32> to vector<1x1x8x128xf32>
      tpu.vector_store %arg4[%c0_23, %c1_24, %c0_25, %c0_26], %43 {strides = array<i32>} : memref<1x4x8x128xf32, #tpu.memory_space<vmem>>, vector<1x1x8x128xf32>,
      %c0_27 = arith.constant 0 : index
      %c2 = arith.constant 2 : index
      %c0_28 = arith.constant 0 : index
      %c0_29 = arith.constant 0 : index
      %44 = vector.load %arg4[%c0_27, %c2, %c0_28, %c0_29] : memref<1x4x8x128xf32, #tpu.memory_space<vmem>>, vector<1x1x8x128xf32>
      %45 = vector.shape_cast %44 : vector<1x1x8x128xf32> to vector<8x128xf32>
      %46 = vector.shape_cast %26 : vector<16x128xf32> to vector<2x8x128xf32>
      %cst_30 = arith.constant dense<0.000000e+00> : vector<8x128xf32>
      %47 = vector.multi_reduction <add>, %46, %cst_30 [0] : vector<2x8x128xf32> to vector<8x128xf32>
      %48 = arith.addf %45, %47 : vector<8x128xf32>
      %c0_31 = arith.constant 0 : index
      %c2_32 = arith.constant 2 : index
      %c0_33 = arith.constant 0 : index
      %c0_34 = arith.constant 0 : index
      %49 = vector.load %arg4[%c0_31, %c2_32, %c0_33, %c0_34] : memref<1x4x8x128xf32, #tpu.memory_space<vmem>>, vector<1x1x8x128xf32>
      %50 = vector.shape_cast %49 : vector<1x1x8x128xf32> to vector<8x128xf32>
      %51 = vector.shape_cast %48 : vector<8x128xf32> to vector<1x1x8x128xf32>
      tpu.vector_store %arg4[%c0_31, %c2_32, %c0_33, %c0_34], %51 {strides = array<i32>} : memref<1x4x8x128xf32, #tpu.memory_space<vmem>>, vector<1x1x8x128xf32>,
      %c0_35 = arith.constant 0 : index
      %c3 = arith.constant 3 : index
      %c0_36 = arith.constant 0 : index
      %c0_37 = arith.constant 0 : index
      %52 = vector.load %arg4[%c0_35, %c3, %c0_36, %c0_37] : memref<1x4x8x128xf32, #tpu.memory_space<vmem>>, vector<1x1x8x128xf32>
      %53 = vector.shape_cast %52 : vector<1x1x8x128xf32> to vector<8x128xf32>
      %54 = vector.shape_cast %9 : vector<16x128xf32> to vector<2x8x128xf32>
      %cst_38 = arith.constant dense<0.000000e+00> : vector<8x128xf32>
      %55 = vector.multi_reduction <add>, %54, %cst_38 [0] : vector<2x8x128xf32> to vector<8x128xf32>
      %56 = arith.addf %53, %55 : vector<8x128xf32>
      %c0_39 = arith.constant 0 : index
      %c3_40 = arith.constant 3 : index
      %c0_41 = arith.constant 0 : index
      %c0_42 = arith.constant 0 : index
      %57 = vector.load %arg4[%c0_39, %c3_40, %c0_41, %c0_42] : memref<1x4x8x128xf32, #tpu.memory_space<vmem>>, vector<1x1x8x128xf32>
      %58 = vector.shape_cast %57 : vector<1x1x8x128xf32> to vector<8x128xf32>
      %59 = vector.shape_cast %56 : vector<8x128xf32> to vector<1x1x8x128xf32>
      tpu.vector_store %arg4[%c0_39, %c3_40, %c0_41, %c0_42], %59 {strides = array<i32>} : memref<1x4x8x128xf32, #tpu.memory_space<vmem>>, vector<1x1x8x128xf32>,
    } else {
    }
    return
  }
  func.func @transform_0(%arg0: i32, %arg1: i32) -> (i32, i32) {
    %c1_i32 = arith.constant 1 : i32
    %0 = arith.muli %arg0, %c1_i32 : i32
    %1 = arith.addi %0, %arg1 : i32
    %c0_i32 = arith.constant 0 : i32
    %2 = arith.minsi %1, %c0_i32 : i32
    %c0_i32_0 = arith.constant 0 : i32
    %c0_i32_1 = arith.constant 0 : i32
    return %2, %c0_i32_0 : i32, i32
  }
  func.func @transform_1(%arg0: i32, %arg1: i32) -> (i32, i32) {
    %c1_i32 = arith.constant 1 : i32
    %0 = arith.muli %arg0, %c1_i32 : i32
    %1 = arith.addi %0, %arg1 : i32
    %c0_i32 = arith.constant 0 : i32
    %2 = arith.minsi %1, %c0_i32 : i32
    %c0_i32_0 = arith.constant 0 : i32
    %c0_i32_1 = arith.constant 0 : i32
    return %2, %c0_i32_0 : i32, i32
  }
  func.func @transform_2(%arg0: i32, %arg1: i32) -> (i32, i32, i32, i32) {
    %c0_i32 = arith.constant 0 : i32
    %c0_i32_0 = arith.constant 0 : i32
    %c0_i32_1 = arith.constant 0 : i32
    %c0_i32_2 = arith.constant 0 : i32
    return %arg0, %c0_i32, %c0_i32_0, %c0_i32_1 : i32, i32, i32, i32
  }
}

</mosaic_0001>

<llo_original>
// kernel: tpu_custom_call.1
$region0: #{tpu_custom_call.1}
  #allocation0 [shape = 'u32[]', space=smem, size = 0x4, offset = 0x4, fixed_abs, tag = 'smem constant byte address 0x4 - core index']
  #allocation1 [shape = 'u32[144,128]{1,0:T(1,128)}', space=vmem, size = 0x12000, scoped, tag = 'internal scratch']
  %s0 = inlined_call_operand.hbm [shape: f32[16,128], index: 0, kind: input, shape index: {}]
  %s1 = inlined_call_operand.hbm [shape: f32[16,128], index: 1, kind: input, shape index: {}]
  %s2 = inlined_call_operand.hbm [shape: f32[2,4,8,128], index: 2, kind: output, shape index: {}]
  %s3 = sld [smem:[#allocation0]]
  $region57: #{tpu_custom_call.1} parent=0
    _
  %s5 = ssub.s32 1, %s3
  %s6 = scalar_select 0, %s5, %s3
  $region1: #{tpu_custom_call.1} parent=0
    #allocation2 [shape = 'u8[16384]{0}', space=vmem, size = 0x4000, scoped, tag = 'input window, operand 0']
    #allocation3 [shape = 's32[2]{0}', space=sflag, size = 0x8, scoped, tag = 'scoped memory for tpu_custom_call.1']
    #allocation4 [shape = 's32[2]{0}', space=sflag, size = 0x8, scoped, tag = 'scoped memory for tpu_custom_call.1']
    #allocation5 [shape = 'u8[16384]{0}', space=vmem, size = 0x4000, scoped, tag = 'input window, operand 1']
    #allocation6 [shape = 's32[2]{0}', space=sflag, size = 0x8, scoped, tag = 'scoped memory for tpu_custom_call.1']
    #allocation7 [shape = 'u8[32768]{0}', space=vmem, size = 0x8000, scoped, tag = 'output window, operand 0']
    %7 = vsyncpa [#allocation3], 0
    %s8 = scalar_lea.sflag [#allocation3], 1
    %9 = vsyncpa %s8, 0
    %10 = vsyncpa [#allocation6], 0
    %s11 = scalar_lea.sflag [#allocation6], 1
    %12 = vsyncpa %s11, 0
    %13 = vsyncpa [#allocation4], 0
    %s14 = scalar_lea.sflag [#allocation4], 1
    %15 = vsyncpa %s14, 0
    loop: start=0, step=1, limit=4
    $region2: #{tpu_custom_call.1} parent=1 // loop_pre_header
      _
    $region3: #{tpu_custom_call.1} parent=1 // loop_header
      %s17 = sphi 0, %s21
      %p18 = scmp.ge.s32.totalorder %s17, 4
      %s24 = sphi 0, %s36
      %s25 = sphi 0, %s32
      %s26 = sphi 0, %s24
      %s27 = sphi 0, %s25
      %s28 = sphi 0, %s26
      %s29 = sphi 0, %s27
      %s45 = sphi 0, %s47
      %s48 = sphi 0, %s45
      %s49 = sphi 0, %s48
      %s65 = sphi 0, %s49
      %s77 = sphi 0, %s79
      %s80 = sphi 0, %s77
      %s81 = sphi 0, %s80
      %s97 = sphi 0, %s81
      %s103 = sphi 0, %s105
      %s106 = sphi 0, %s103
      %s107 = sphi 0, %s106
      %s123 = sphi 0, %s107
    $region4: #{tpu_custom_call.1} parent=1 // loop_header_branch
      %20 = sbr.rel (%p18) target = $region8
    $region5: #{tpu_custom_call.1} parent=1 // loop_body
      %s22 = ssub.s32 %s17, 1
      %s23 = ssub.s32 %s17, 2
      %s30 = sadd.s32 1, %s25
      %p31 = scmp.ge.s32.totalorder %s30, 1
      %s32 = scalar_select %p31, 0, %s30
      %s33 = sadd.s32 1, %s24
      %s34 = scalar_select %p31, %s33, %s24
      %p35 = scmp.ge.s32.totalorder %s34, 2
      %s36 = scalar_select %p35, 0, %s34
      %s37 = sadd.s32 %s24, %s25
      %p38 = scmp.lt.s32.totalorder %s37, 0
      %s39 = scalar_select %p38, %s37, 0
      %s40 = sadd.s32 %s36, %s32
      %p41 = scmp.lt.s32.totalorder %s40, 0
      %s42 = scalar_select %p41, %s40, 0
      %s43 = ssub.s32 %s39, %s42
      %p44 = scmp.eq.s32.totalorder %s43, 0
      %s46 = sadd.s32 %s45, 1
      %s47 = scalar_select %p44, %s45, %s46
      %p50 = pneg %p44
      %p51 = scmp.eq.s32.totalorder %s17, 1
      %p52 = por %p50, %p51
      %p53 = scmp.ne.s32.totalorder %s45, %s48
      %p54 = scmp.eq.s32.totalorder %s17, 0
      %p55 = por %p53, %p54
      %p56 = scmp.ne.s32.totalorder %s45, %s48
      %p57 = scmp.eq.s32.totalorder %s22, 1
      %p58 = por %p56, %p57
      %p59 = scmp.ne.s32.totalorder %s48, %s49
      %p60 = scmp.eq.s32.totalorder %s22, 0
      %p61 = por %p59, %p60
      %p62 = scmp.ne.s32.totalorder %s48, %s49
      %p63 = scmp.eq.s32.totalorder %s23, 1
      %p64 = por %p62, %p63
      %p66 = scmp.ne.s32.totalorder %s49, %s65
      %p67 = scmp.eq.s32.totalorder %s23, 0
      %p68 = por %p66, %p67
      %s69 = sadd.s32 %s24, %s25
      %p70 = scmp.lt.s32.totalorder %s69, 0
      %s71 = scalar_select %p70, %s69, 0
      %s72 = sadd.s32 %s36, %s32
      %p73 = scmp.lt.s32.totalorder %s72, 0
      %s74 = scalar_select %p73, %s72, 0
      %s75 = ssub.s32 %s71, %s74
      %p76 = scmp.eq.s32.totalorder %s75, 0
      %s78 = sadd.s32 %s77, 1
      %s79 = scalar_select %p76, %s77, %s78
      %p82 = pneg %p76
      %p83 = scmp.eq.s32.totalorder %s17, 1
      %p84 = por %p82, %p83
      %p85 = scmp.ne.s32.totalorder %s77, %s80
      %p86 = scmp.eq.s32.totalorder %s17, 0
      %p87 = por %p85, %p86
      %p88 = scmp.ne.s32.totalorder %s77, %s80
      %p89 = scmp.eq.s32.totalorder %s22, 1
      %p90 = por %p88, %p89
      %p91 = scmp.ne.s32.totalorder %s80, %s81
      %p92 = scmp.eq.s32.totalorder %s22, 0
      %p93 = por %p91, %p92
      %p94 = scmp.ne.s32.totalorder %s80, %s81
      %p95 = scmp.eq.s32.totalorder %s23, 1
      %p96 = por %p94, %p95
      %p98 = scmp.ne.s32.totalorder %s81, %s97
      %p99 = scmp.eq.s32.totalorder %s23, 0
      %p100 = por %p98, %p99
      %s101 = ssub.s32 %s24, %s36
      %p102 = scmp.eq.s32.totalorder %s101, 0
      %s104 = sadd.s32 %s103, 1
      %s105 = scalar_select %p102, %s103, %s104
      %p108 = pneg %p102
      %p109 = scmp.eq.s32.totalorder %s17, 1
      %p110 = por %p108, %p109
      %p111 = scmp.ne.s32.totalorder %s103, %s106
      %p112 = scmp.eq.s32.totalorder %s17, 0
      %p113 = por %p111, %p112
      %p114 = scmp.ne.s32.totalorder %s103, %s106
      %p115 = scmp.eq.s32.totalorder %s22, 1
      %p116 = por %p114, %p115
      %p117 = scmp.ne.s32.totalorder %s106, %s107
      %p118 = scmp.eq.s32.totalorder %s22, 0
      %p119 = por %p117, %p118
      %p120 = scmp.ne.s32.totalorder %s106, %s107
      %p121 = scmp.eq.s32.totalorder %s23, 1
      %p122 = por %p120, %p121
      %p124 = scmp.ne.s32.totalorder %s107, %s123
      %p125 = scmp.eq.s32.totalorder %s23, 0
      %p126 = por %p124, %p125
      %p127 = scmp.le.s32.totalorder 1, %s17
      %p128 = scmp.lt.s32.totalorder %s17, 3
      %p129 = pnand %p127, %p128
      %p130 = pneg %p129
      // Predicated region
      $region9: #{tpu_custom_call.1} parent=5 // pred_check
        _
      $region10: #{tpu_custom_call.1} parent=5 // pred_check_branch
        %132 = sbr.rel (%p129) target = $region12
      $region11: #{tpu_custom_call.1} parent=5 // pred_region
        %s133 = ssub.s32 %s17, 1
      $region12: #{tpu_custom_call.1} parent=5 // pred_fallthru
        _
      %p134 = scmp.lt.s32.totalorder %s17, 2
      // Predicated region
      $region13: #{tpu_custom_call.1} parent=5 // pred_check
        %p135 = pneg %p134
      $region14: #{tpu_custom_call.1} parent=5 // pred_check_branch
        %137 = sbr.rel (%p135) target = $region16
      $region15: #{tpu_custom_call.1} parent=5 // pred_region
        // Predicated region
        $region17: #{tpu_custom_call.1} parent=15 // pred_check
          %p138 = pneg %p55
        $region18: #{tpu_custom_call.1} parent=15 // pred_check_branch
          %140 = sbr.rel (%p138) target = $region20
        $region19: #{tpu_custom_call.1} parent=15 // pred_region
          %s141 = sand.u32 %s45, 1
          %s142 = scalar_lea.sflag [#allocation3], %s141
          %s143 = sand.u32 %s45, 1
          %s144 = smul.addr %s143, 16
          %s145 = scalar_lea.vmem [#allocation2], %s144
          %s146 = sadd.s32 %s24, %s25
          %p147 = scmp.lt.s32.totalorder %s146, 0
          %s148 = scalar_select %p147, %s146, 0
          %s149 = smul.u32 2, %s148
          %s151 = ssub.s32 256, 256
          %152 = vsyncadd %s142, %s151
          %s153 = smul.addr %s149, 128
          %s154 = scalar_lea.hbm %s0, %s153
          %s155 = sshll.u32 %s145, 4
          %s156 = int_to_ptr.vmem [resolvable:$true] %s155
          %161 = dma.hbm_to_vmem [thread:$0]  %s154, 256, %s156, %s142, 128, 128, 8
        $region20: #{tpu_custom_call.1} parent=15 // pred_fallthru
          _
        // Predicated region
        $region21: #{tpu_custom_call.1} parent=15 // pred_check
          %p162 = pneg %p87
        $region22: #{tpu_custom_call.1} parent=15 // pred_check_branch
          %164 = sbr.rel (%p162) target = $region24
        $region23: #{tpu_custom_call.1} parent=15 // pred_region
          %s165 = sand.u32 %s77, 1
          %s166 = scalar_lea.sflag [#allocation6], %s165
          %s167 = sand.u32 %s77, 1
          %s168 = smul.addr %s167, 16
          %s169 = scalar_lea.vmem [#allocation5], %s168
          %s170 = sadd.s32 %s24, %s25
          %p171 = scmp.lt.s32.totalorder %s170, 0
          %s172 = scalar_select %p171, %s170, 0
          %s173 = smul.u32 2, %s172
          %s175 = ssub.s32 256, 256
          %176 = vsyncadd %s166, %s175
          %s177 = smul.addr %s173, 128
          %s178 = scalar_lea.hbm %s1, %s177
          %s179 = sshll.u32 %s169, 4
          %s180 = int_to_ptr.vmem [resolvable:$true] %s179
          %185 = dma.hbm_to_vmem [thread:$0]  %s178, 256, %s180, %s166, 128, 128, 8
        $region24: #{tpu_custom_call.1} parent=15 // pred_fallthru
          _
      $region16: #{tpu_custom_call.1} parent=5 // pred_fallthru
        _
      %p186 = scmp.le.s32.totalorder 1, %s17
      %p187 = scmp.lt.s32.totalorder %s17, 3
      %p188 = pnand %p186, %p187
      %p189 = pneg %p188
      // Predicated region
      $region25: #{tpu_custom_call.1} parent=5 // pred_check
        _
      $region26: #{tpu_custom_call.1} parent=5 // pred_check_branch
        %191 = sbr.rel (%p188) target = $region28
      $region27: #{tpu_custom_call.1} parent=5 // pred_region
        %s192 = ssub.s32 %s17, 1
        %s193 = sand.u32 %s48, 1
        %s194 = scalar_lea.sflag [#allocation3], %s193
        %s195 = sand.u32 %s48, 1
        %s196 = smul.addr %s195, 16
        %s197 = scalar_lea.vmem [#allocation2], %s196
        // Predicated region
        $region29: #{tpu_custom_call.1} parent=27 // pred_check
          %p198 = pneg %p61
        $region30: #{tpu_custom_call.1} parent=27 // pred_check_branch
          %200 = sbr.rel (%p198) target = $region32
        $region31: #{tpu_custom_call.1} parent=27 // pred_region
          %201 = dma.done %s194, 256
        $region32: #{tpu_custom_call.1} parent=27 // pred_fallthru
          _
        %s202 = sand.u32 %s80, 1
        %s203 = scalar_lea.sflag [#allocation6], %s202
        %s204 = sand.u32 %s80, 1
        %s205 = smul.addr %s204, 16
        %s206 = scalar_lea.vmem [#allocation5], %s205
        // Predicated region
        $region33: #{tpu_custom_call.1} parent=27 // pred_check
          %p207 = pneg %p93
        $region34: #{tpu_custom_call.1} parent=27 // pred_check_branch
          %209 = sbr.rel (%p207) target = $region36
        $region35: #{tpu_custom_call.1} parent=27 // pred_region
          %210 = dma.done %s203, 256
        $region36: #{tpu_custom_call.1} parent=27 // pred_fallthru
          _
        %s211 = sand.u32 %s48, 1
        %s212 = scalar_lea.sflag [#allocation3], %s211
        %s213 = sand.u32 %s48, 1
        %s214 = smul.addr %s213, 16
        %s215 = scalar_lea.vmem [#allocation2], %s214
        %p216 = pneg %p61
        %p217 = pneg %p58
        %s218 = sand.u32 %s80, 1
        %s219 = scalar_lea.sflag [#allocation6], %s218
        %s220 = sand.u32 %s80, 1
        %s221 = smul.addr %s220, 16
        %s222 = scalar_lea.vmem [#allocation5], %s221
        %p223 = pneg %p93
        %p224 = pneg %p90
        %p225 = pneg %p119
        %p226 = pneg %p116
        %s227 = sand.u32 %s106, 1
        %s228 = scalar_lea.sflag [#allocation4], %s227
        %s229 = sand.u32 %s106, 1
        %s230 = smul.addr %s229, 32
        %s231 = scalar_lea.vmem [#allocation7], %s230
        %s232 = sadd.s32 %s26, %s27
        %p233 = scmp.lt.s32.totalorder %s232, 0
        %s234 = scalar_select %p233, %s232, 0
        %s235 = smul.u32 2, %s234
        %s236 = sadd.s32 %s26, %s27
        %p237 = scmp.lt.s32.totalorder %s236, 0
        %s238 = scalar_select %p237, %s236, 0
        %s239 = smul.u32 2, %s238
        %s240 = sadd.s32 %s26, %s27
        %p241 = scmp.eq.s32.totalorder %s27, 0
        // Predicated region
        $region37: #{tpu_custom_call.1} parent=27 // pred_check
          %p242 = pneg %p241
        $region38: #{tpu_custom_call.1} parent=27 // pred_check_branch
          %244 = sbr.rel (%p242) target = $region40
        $region39: #{tpu_custom_call.1} parent=27 // pred_region
          %245 = vst [vmem:[%s231] sm:$0xff] 0.0
          %246 = vst [vmem:[%s231 + $0x8] sm:$0xff] 0.0
          %247 = vst [vmem:[%s231 + $0x10] sm:$0xff] 0.0
          %248 = vst [vmem:[%s231 + $0x18] sm:$0xff] 0.0
        $region40: #{tpu_custom_call.1} parent=27 // pred_fallthru
          _
        %p249 = scmp.lt.s32.totalorder %s240, 1
        // Predicated region
        $region41: #{tpu_custom_call.1} parent=27 // pred_check
          %p250 = pneg %p249
        $region42: #{tpu_custom_call.1} parent=27 // pred_check_branch
          %252 = sbr.rel (%p250) target = $region44
        $region43: #{tpu_custom_call.1} parent=27 // pred_region
          %v253 = vld [vmem:[%s197] sm:$0xff]
          %v254 = vld [vmem:[%s197 + $0x8] sm:$0xff]
          %v255 = vld [vmem:[%s206] sm:$0xff]
          %v256 = vld [vmem:[%s206 + $0x8] sm:$0xff]
          %v257 = vand.u32 2147483647, %v253
          %v258 = vand.u32 2147483647, %v254
          %v259 = vsub.f32 0.0, %v257
          %v260 = vsub.f32 0.0, %v258
          %v261 = vmul.f32 %v259, 1.442695
          %v262 = vpow.pop %v261
          %v263 = vmul.f32 %v260, 1.442695
          %v264 = vpow.pop %v263
          %v265 = vmax.f32 %v253, 0.0
          %v266 = vmax.f32 %v254, 0.0
          %v267 = vmul.f32 %v253, %v255
          %v268 = vmul.f32 %v254, %v256
          %v269 = vsub.f32 %v265, %v267
          %v270 = vsub.f32 %v266, %v268
          %v271 = vadd.f32 %v262, 1.0
          %v272 = vlog2.pop %v271
          %v273 = vmul.f32 %v272, 0.6931472
          %v274 = vmul.f32 -0.5, %v262
          %v275 = vadd.f32 %v274, 1.0
          %v276 = vmul.f32 %v275, %v262
          %v277 = vand.u32 2147483647, %v262
          %vm278 = vcmp.lt.f32.partialorder %v277, 0.0004427343
          %v279 = vsel %vm278, %v276, %v273
          %v280 = vadd.f32 %v264, 1.0
          %v281 = vlog2.pop %v280
          %v282 = vmul.f32 %v281, 0.6931472
          %v283 = vmul.f32 -0.5, %v264
          %v284 = vadd.f32 %v283, 1.0
          %v285 = vmul.f32 %v284, %v264
          %v286 = vand.u32 2147483647, %v264
          %vm287 = vcmp.lt.f32.partialorder %v286, 0.0004427343
          %v288 = vsel %vm287, %v285, %v282
          %v289 = vadd.f32 %v269, %v279
          %v290 = vadd.f32 %v270, %v288
          %v291 = vmul.f32 %v253, 0.5
          %v292 = vmul.f32 %v254, 0.5
          %v293 = vtanh.pop %v291
          %v294 = vtanh.pop %v292
          %v295 = vmul.f32 %v293, 0.5
          %v296 = vmul.f32 %v294, 0.5
          %v297 = vadd.f32 %v295, 0.5
          %v298 = vadd.f32 %v296, 0.5
          %v299 = vld [vmem:[%s231] sm:$0xff]
          %v300 = vadd.f32 %v289, %v290
          %v301 = vadd.f32 %v299, %v300
          %302 = vst [vmem:[%s231] sm:$0xff] %v301
          %s303 = scalar_lea.vmem %s231, 8 [#allocation7]
          %v304 = vld [vmem:[%s303] sm:$0xff]
          %v305 = vmul.f32 %v297, %v255
          %v306 = vmul.f32 %v298, %v256
          %v307 = vadd.f32 %v305, %v306
          %v308 = vadd.f32 %v304, %v307
          %309 = vst [vmem:[%s303] sm:$0xff] %v308
          %s310 = scalar_lea.vmem %s231, 16 [#allocation7]
          %v311 = vld [vmem:[%s310] sm:$0xff]
          %v312 = vadd.f32 %v297, %v298
          %v313 = vadd.f32 %v311, %v312
          %314 = vst [vmem:[%s310] sm:$0xff] %v313
          %s315 = scalar_lea.vmem %s231, 24 [#allocation7]
          %v316 = vld [vmem:[%s315] sm:$0xff]
          %v317 = vadd.f32 %v255, %v256
          %v318 = vadd.f32 %v316, %v317
          %319 = vst [vmem:[%s315] sm:$0xff] %v318
        $region44: #{tpu_custom_call.1} parent=27 // pred_fallthru
          _
        %s320 = sand.u32 %s106, 1
        %s321 = scalar_lea.sflag [#allocation4], %s320
        %s322 = sand.u32 %s106, 1
        %s323 = smul.addr %s322, 32
        %s324 = scalar_lea.vmem [#allocation7], %s323
        // Predicated region
        $region45: #{tpu_custom_call.1} parent=27 // pred_check
          %p325 = pneg %p116
        $region46: #{tpu_custom_call.1} parent=27 // pred_check_branch
          %327 = sbr.rel (%p325) target = $region48
        $region47: #{tpu_custom_call.1} parent=27 // pred_region
          %s329 = ssub.s32 512, 512
          %330 = vsyncadd %s321, %s329
          %s331 = smul.addr %s26, 4
          %s332 = smul.addr %s331, 128
          %s333 = scalar_lea.hbm %s2, %s332
          %s334 = sshll.u32 %s324, 4
          %s335 = int_to_ptr.vmem [resolvable:$true] %s334
          %340 = dma.vmem_to_hbm [thread:$0]  %s335, 512, %s333, %s321, 128, 128, 8
        $region48: #{tpu_custom_call.1} parent=27 // pred_fallthru
          _
      $region28: #{tpu_custom_call.1} parent=5 // pred_fallthru
        _
      %p341 = scmp.le.s32.totalorder 2, %s17
      // Predicated region
      $region49: #{tpu_custom_call.1} parent=5 // pred_check
        %p342 = pneg %p341
      $region50: #{tpu_custom_call.1} parent=5 // pred_check_branch
        %344 = sbr.rel (%p342) target = $region52
      $region51: #{tpu_custom_call.1} parent=5 // pred_region
        %s345 = ssub.s32 %s17, 2
        // Predicated region
        $region53: #{tpu_custom_call.1} parent=51 // pred_check
          %p346 = pneg %p122
        $region54: #{tpu_custom_call.1} parent=51 // pred_check_branch
          %348 = sbr.rel (%p346) target = $region56
        $region55: #{tpu_custom_call.1} parent=51 // pred_region
          %s349 = sand.u32 %s107, 1
          %s350 = scalar_lea.sflag [#allocation4], %s349
          %s351 = sand.u32 %s107, 1
          %s352 = smul.addr %s351, 32
          %s353 = scalar_lea.vmem [#allocation7], %s352
          %354 = dma.done %s350, 512
        $region56: #{tpu_custom_call.1} parent=51 // pred_fallthru
          _
      $region52: #{tpu_custom_call.1} parent=5 // pred_fallthru
        _
    $region6: #{tpu_custom_call.1} parent=1 // loop_footer
      %s21 = sadd.s32 1, %s17
    $region7: #{tpu_custom_call.1} parent=1 // loop_footer_branch
      %16 = sbr.rel target = $region3
    $region8: #{tpu_custom_call.1} parent=1 // loop_exit
      _
    %355 = vsyncpa [#allocation3], 1
    %s356 = scalar_lea.sflag [#allocation3], 1
    %357 = vsyncpa %s356, 1
    %358 = vsyncpa [#allocation6], 1
    %s359 = scalar_lea.sflag [#allocation6], 1
    %360 = vsyncpa %s359, 1
    %361 = vsyncpa [#allocation4], 1
    %s362 = scalar_lea.sflag [#allocation4], 1
    %363 = vsyncpa %s362, 1

</llo_original>
